<compile_context>
chip_gen: v7x
topology: tpu7x:2x2x1
jax: 0.10.0
libtpu: 0.0.40
codegen_flags: <defaults>
</compile_context>

<pallas_src>
import jax
import jax.numpy as jnp
from jax import lax
from jax.experimental import pallas as pl
from jax.experimental.pallas import tpu as pltpu


# Re-derive for v7x (64 MiB physical VMEM) if tile sizes are grown.
VMEM_LIMIT_BYTES = 64 * 1024 * 1024


# ----------------------------- Pallas kernels ------------------------------ #

def fused_linear_kernel(x_ref, wt_ref, b_ref, o_ref):
    # x: (tm, K), wt: (K, N), b: (1, N) -> o: (tm, N)
    # bf16 operands on the MXU, f32 accumulation, bias add in f32.
    x = x_ref[...].astype(jnp.bfloat16)
    w = wt_ref[...].astype(jnp.bfloat16)
    y = jnp.dot(x, w, preferred_element_type=jnp.float32) + b_ref[...]
    o_ref[...] = y.astype(o_ref.dtype)


def attn_kernel(q_ref, k_ref, v_ref, sq_ref, sk_ref, mask_ref,
                ctx_ref, scores_ref, m_sc, l_sc, acc_sc):
    """One (batch, kv_tile) grid step; all heads of the batch processed here.

    Shapes of the blocks:
      q_ref      : (1, nH, L, d)        (resident across kv steps)
      k_ref/v_ref: (1, nH, tkv, d)
      sq_ref/sk_ref: (1, L, tkv, d)     (bf16, shared by all heads)
      mask_ref   : (1, 1, L, tkv)
      ctx_ref    : (1, nH, L, d)        (written at last kv step)
      scores_ref : (1, nH, L, tkv)
      scratch    : m (nH,L,1), l (nH,L,1), acc (nH,L,d)  -- online softmax state
    """
    num_heads = q_ref.shape[1]
    kv = pl.program_id(1)
    n_kv = pl.num_programs(1)

    @pl.when(kv == 0)
    def _():
        m_sc[...] = jnp.full_like(m_sc, -jnp.inf)
        l_sc[...] = jnp.zeros_like(l_sc)
        acc_sc[...] = jnp.zeros_like(acc_sc)

    # Structure tiles are shared across heads: load/cast once per grid step.
    sq = sq_ref[0].astype(jnp.float32)        # (L, tkv, d)
    sk = sk_ref[0].astype(jnp.float32)        # (L, tkv, d)
    mask = mask_ref[0, 0]                     # (L, tkv)

    for h in range(num_heads):                # static unroll (nH is small)
        # Fold the 1/4 scale into q: covers both QK^T and the q-structure term.
        q = q_ref[0, h] * 0.25                # (L, d)  f32
        k = k_ref[0, h]                       # (tkv, d)
        v = v_ref[0, h]                       # (tkv, d)

        # QK^T on the MXU, NT form (no explicit k.T), bf16 in / f32 out.
        s = lax.dot_general(
            q.astype(jnp.bfloat16), k.astype(jnp.bfloat16),
            dimension_numbers=(((1,), (1,)), ((), ())),
            preferred_element_type=jnp.float32)                   # (L, tkv)

        # Structure biases: einsum('ld,lrd->lr', q, sq) + ('rd,lrd->lr', k, sk).
        # Temps are tile-bounded (L, tkv, d) now that the r axis is tiled.
        # TODO(synk): could be moved onto the MXU via a batched dot_general
        #             (batch over l / r); kept as VPU multiply+reduce for
        #             lowering robustness.
        s = s + jnp.sum(q[:, None, :] * sq, axis=-1)
        s = s + jnp.sum((k * 0.25)[None, :, :] * sk, axis=-1)

        s = s + mask
        scores_ref[0, h] = s                  # pre-softmax scores (module output)

        # Flash-style online softmax for this head.
        m_prev = m_sc[h]                                          # (L, 1)
        m_new = jnp.maximum(m_prev, jnp.max(s, axis=-1, keepdims=True))
        alpha = jnp.exp(m_prev - m_new)
        p = jnp.exp(s - m_new)                                    # (L, tkv)
        l_sc[h] = alpha * l_sc[h] + jnp.sum(p, axis=-1, keepdims=True)
        acc_sc[h] = alpha * acc_sc[h] + jnp.dot(
            p.astype(jnp.bfloat16), v.astype(jnp.bfloat16),
            preferred_element_type=jnp.float32)                   # (L, d)
        m_sc[h] = m_new

    @pl.when(kv == n_kv - 1)
    def _():
        # dropout == identity (eval mode)
        inv_l = pl.reciprocal(l_sc[...], approx=False)            # EUP
        ctx_ref[0] = (acc_sc[...] * inv_l).astype(ctx_ref.dtype)


# ------------------------------ wrappers ----------------------------------- #

def pallas_linear(x2d, weight, bias, *, out_dtype=jnp.float32, tile_m=512):
    """y = x2d @ weight.T + bias (PyTorch nn.Linear semantics), tiled over M."""
    M, K = x2d.shape
    N = weight.shape[0]
    wt = weight.T                          # (K, N)
    b2 = bias.reshape(1, N).astype(jnp.float32)

    tm = min(tile_m, M)                    # tm == M (full) or a multiple of 8
    grid = (pl.cdiv(M, tm),)
    return pl.pallas_call(
        fused_linear_kernel,
        out_shape=jax.ShapeDtypeStruct((M, N), out_dtype),
        grid=grid,
        in_specs=[
            pl.BlockSpec((tm, K), lambda i: (i, 0)),
            pl.BlockSpec((K, N), lambda i: (0, 0)),
            pl.BlockSpec((1, N), lambda i: (0, 0)),
        ],
        out_specs=pl.BlockSpec((tm, N), lambda i: (i, 0)),
        compiler_params=pltpu.CompilerParams(
            dimension_semantics=("parallel",),
            vmem_limit_bytes=VMEM_LIMIT_BYTES),
    )(x2d, wt, b2)


def _pick_kv_tile(L):
    # Blocks along the key axis must be a multiple of 128 or the full extent.
    if L % 128 == 0 and L > 256:
        return 256 if L % 256 == 0 else 128
    return L


def self_attention_forward(params, hidden_states, attention_mask, structure_matrix,
                           num_heads, head_size, *, kv_tile=None):
    B, L, H = hidden_states.shape
    all_head = num_heads * head_size

    # ---- fused Q/K/V projection: one (B*L, H) x (H, 3*all_head) matmul ------
    w_qkv = jnp.concatenate([params["wq"], params["wk"], params["wv"]], axis=0)
    b_qkv = jnp.concatenate([params["bq"], params["bk"], params["bv"]], axis=0)
    qkv = pallas_linear(hidden_states.reshape(B * L, H), w_qkv, b_qkv,
                        out_dtype=jnp.float32)            # (B*L, 3*all_head)
    qkv = qkv.reshape(B, L, 3, num_heads, head_size)
    # transpose_for_scores: (B, L, nH, d) -> (B, nH, L, d). Small activations;
    # this XLA transpose is negligible next to the structure tensors.
    q = jnp.transpose(qkv[:, :, 0], (0, 2, 1, 3))
    k = jnp.transpose(qkv[:, :, 1], (0, 2, 1, 3))
    v = jnp.transpose(qkv[:, :, 2], (0, 2, 1, 3))

    # ---- fused structure projection: (B*L*L, H) x (H, 2*d), bf16 output -----
    w_s = jnp.concatenate([params["wsq"], params["wsk"]], axis=0)   # (2d, H)
    b_s = jnp.concatenate([params["bsq"], params["bsk"]], axis=0)
    s_proj = pallas_linear(structure_matrix.reshape(B * L * L, H), w_s, b_s,
                           out_dtype=jnp.bfloat16)        # (B*L*L, 2d)
    s_proj = s_proj.reshape(B, L, L, 2, head_size)
    sq = s_proj[:, :, :, 0, :]       # structure_query  (B, L, L, d)  bf16
    sk = s_proj[:, :, :, 1, :]       # structure_key    (B, L, L, d)  bf16

    if attention_mask is None:
        attention_mask = jnp.zeros((B, 1, L, L), jnp.float32)

    if kv_tile is None:
        kv_tile = _pick_kv_tile(L)
    if L % kv_tile != 0 or (kv_tile != L and kv_tile % 128 != 0):
        kv_tile = L
    n_kv = L // kv_tile

    # ---- attention core: grid = (batch, kv_tiles) ---------------------------
    ctx, scores = pl.pallas_call(
        attn_kernel,
        out_shape=(
            jax.ShapeDtypeStruct((B, num_heads, L, head_size), jnp.float32),
            jax.ShapeDtypeStruct((B, num_heads, L, L), jnp.float32),
        ),
        grid=(B, n_kv),
        in_specs=[
            pl.BlockSpec((1, num_heads, L, head_size),
                         lambda b, kv: (b, 0, 0, 0)),                  # q
            pl.BlockSpec((1, num_heads, kv_tile, head_size),
                         lambda b, kv: (b, 0, kv, 0)),                 # k
            pl.BlockSpec((1, num_heads, kv_tile, head_size),
                         lambda b, kv: (b, 0, kv, 0)),                 # v
            pl.BlockSpec((1, L, kv_tile, head_size),
                         lambda b, kv: (b, 0, kv, 0)),                 # structure_query
            pl.BlockSpec((1, L, kv_tile, head_size),
                         lambda b, kv: (b, 0, kv, 0)),                 # structure_key
            pl.BlockSpec((1, 1, L, kv_tile),
                         lambda b, kv: (b, 0, 0, kv)),                 # additive mask
        ],
        out_specs=(
            pl.BlockSpec((1, num_heads, L, head_size),
                         lambda b, kv: (b, 0, 0, 0)),                  # ctx (resident)
            pl.BlockSpec((1, num_heads, L, kv_tile),
                         lambda b, kv: (b, 0, 0, kv)),                 # scores
        ),
        scratch_shapes=[
            pltpu.VMEM((num_heads, L, 1), jnp.float32),   # running max
            pltpu.VMEM((num_heads, L, 1), jnp.float32),   # running denom
            pltpu.VMEM((num_heads, L, head_size), jnp.float32),  # running ctx acc
        ],
        compiler_params=pltpu.CompilerParams(
            dimension_semantics=("parallel", "arbitrary"),
            vmem_limit_bytes=VMEM_LIMIT_BYTES),
    )(q, k, v, sq, sk, attention_mask)

    # (B, nH, L, d) -> (B, L, nH*d)
    context = jnp.transpose(ctx, (0, 2, 1, 3)).reshape(B, L, all_head)
    return context, scores


# ----------------------------- reference (JAX) ----------------------------- #

def reference_forward(params, hidden_states, attention_mask, structure_matrix,
                      num_heads, head_size):
    B, L, H = hidden_states.shape

    def lin(x, w, b):
        return x @ w.T + b

    def t4s(x):
        return jnp.transpose(x.reshape(B, L, num_heads, head_size), (0, 2, 1, 3))

    q = t4s(lin(hidden_states, params["wq"], params["bq"]))
    k = t4s(lin(hidden_states, params["wk"], params["bk"]))
    v = t4s(lin(hidden_states, params["wv"], params["bv"]))
    sq = lin(structure_matrix, params["wsq"], params["bsq"])
    sk = lin(structure_matrix, params["wsk"], params["bsk"])

    scores = jnp.einsum("bhld,bhrd->bhlr", q, k)
    scores = scores + jnp.einsum("bhld,blrd->bhlr", q, sq)
    scores = scores + jnp.einsum("bhrd,blrd->bhlr", k, sk)
    scores = scores / 4.0 + attention_mask
    probs = jax.nn.softmax(scores, axis=-1)
    ctx = jnp.einsum("bhlr,bhrd->bhld", probs, v)
    ctx = jnp.transpose(ctx, (0, 2, 1, 3)).reshape(B, L, num_heads * head_size)
    return ctx, scores


# --------------------------------- main ------------------------------------ #

if __name__ == "__main__":
    B, L, H = 2, 8, 32
    num_heads, head_size = 2, 16

    key = jax.random.PRNGKey(0)
    ks = jax.random.split(key, 16)

    def init_linear(kw, kb, out_f, in_f):
        bound = 1.0 / (in_f ** 0.5)
        w = jax.random.uniform(kw, (out_f, in_f), jnp.float32, -bound, bound)
        b = jax.random.uniform(kb, (out_f,), jnp.float32, -bound, bound)
        return w, b

    all_head = num_heads * head_size
    params = {}
    params["wq"], params["bq"] = init_linear(ks[0], ks[1], all_head, H)
    params["wk"], params["bk"] = init_linear(ks[2], ks[3], all_head, H)
    params["wv"], params["bv"] = init_linear(ks[4], ks[5], all_head, H)
    params["wsq"], params["bsq"] = init_linear(ks[6], ks[7], head_size, H)
    params["wsk"], params["bsk"] = init_linear(ks[8], ks[9], head_size, H)

    hidden_states = jax.random.normal(ks[10], (B, L, H), jnp.float32)
    structure_matrix = jax.random.normal(ks[11], (B, L, L, H), jnp.float32)
    # additive mask: 0 for keep, -1e9 for masked-out positions
    mask_keep = (jax.random.uniform(ks[12], (B, 1, L, L)) > 0.1).astype(jnp.float32)
    attention_mask = (1.0 - mask_keep) * -1e9

    ctx, scores = self_attention_forward(
        params, hidden_states, attention_mask, structure_matrix,
        num_heads, head_size)
    jax.block_until_ready((ctx, scores))

    ref_ctx, ref_scores = reference_forward(
        params, hidden_states, attention_mask, structure_matrix,
        num_heads, head_size)

    assert ctx.shape == (B, L, all_head)
    assert scores.shape == (B, num_heads, L, L)
    # bf16 MXU operands with f32 accumulation -> relaxed (but tight enough)
    # tolerances vs. the pure-f32 reference.
    assert jnp.allclose(ctx, ref_ctx, atol=5e-2, rtol=5e-2), \
        float(jnp.max(jnp.abs(ctx - ref_ctx)))
    assert jnp.allclose(scores, ref_scores, atol=5e-2, rtol=5e-2), \
        float(jnp.max(jnp.abs(scores - ref_scores)))

    print("KERNEL_OK")
</pallas_src>

<mosaic_0001>
module attributes {stable_mosaic.version = 11 : i64} {
  func.func @fused_linear_kernel(%arg0: i32, %arg1: memref<16x32xf32, #tpu.memory_space<vmem>>, %arg2: memref<32x96xf32, #tpu.memory_space<vmem>>, %arg3: memref<1x96xf32, #tpu.memory_space<vmem>>, %arg4: memref<16x96xf32, #tpu.memory_space<vmem>>) attributes {dimension_semantics = [#tpu.dimension_semantics<parallel>], iteration_bounds = array<i64: 1>, scalar_prefetch = 0 : i64, scratch_operands = 0 : i64, tpu.core_type = #tpu.core_type<tc>, window_params = [{transform_indices = @transform_0, window_bounds = array<i64: 16, 32>}, {pipeline_mode = #tpu.pipeline_mode<synchronous>, transform_indices = @transform_1, window_bounds = array<i64: 32, 96>}, {pipeline_mode = #tpu.pipeline_mode<synchronous>, transform_indices = @transform_2, window_bounds = array<i64: 1, 96>}, {transform_indices = @transform_3, window_bounds = array<i64: 16, 96>}]} {
    %c0 = arith.constant 0 : index
    %c0_0 = arith.constant 0 : index
    %0 = vector.load %arg1[%c0, %c0_0] : memref<16x32xf32, #tpu.memory_space<vmem>>, vector<16x32xf32>
    %1 = arith.truncf %0 : vector<16x32xf32> to vector<16x32xbf16>
    %c0_1 = arith.constant 0 : index
    %c0_2 = arith.constant 0 : index
    %2 = vector.load %arg2[%c0_1, %c0_2] : memref<32x96xf32, #tpu.memory_space<vmem>>, vector<32x96xf32>
    %3 = arith.truncf %2 : vector<32x96xf32> to vector<32x96xbf16>
    %cst = arith.constant dense<0.000000e+00> : vector<16x96xf32>
    %4 = tpu.matmul %1, %3, %cst {dimension_numbers = #tpu.dot_dimension_numbers<[1], [0], [0], [1], [0, 0, 1, 1], [], []>} : vector<16x32xbf16>, vector<32x96xbf16>, vector<16x96xf32> -> vector<16x96xf32>
    %c0_3 = arith.constant 0 : index
    %c0_4 = arith.constant 0 : index
    %5 = vector.load %arg3[%c0_3, %c0_4] : memref<1x96xf32, #tpu.memory_space<vmem>>, vector<1x96xf32>
    %6 = vector.broadcast %5 : vector<1x96xf32> to vector<16x96xf32>
    %7 = arith.addf %4, %6 : vector<16x96xf32>
    %c0_5 = arith.constant 0 : index
    %c0_6 = arith.constant 0 : index
    %8 = vector.load %arg4[%c0_5, %c0_6] : memref<16x96xf32, #tpu.memory_space<vmem>>, vector<16x96xf32>
    tpu.vector_store %arg4[%c0_5, %c0_6], %7 {strides = array<i32>} : memref<16x96xf32, #tpu.memory_space<vmem>>, vector<16x96xf32>,
    return
  }
  func.func @transform_0(%arg0: i32) -> (i32, i32) {
    %c0_i32 = arith.constant 0 : i32
    %c0_i32_0 = arith.constant 0 : i32
    return %arg0, %c0_i32 : i32, i32
  }
  func.func @transform_1(%arg0: i32) -> (i32, i32) {
    %c0_i32 = arith.constant 0 : i32
    %c0_i32_0 = arith.constant 0 : i32
    %c0_i32_1 = arith.constant 0 : i32
    return %c0_i32, %c0_i32_0 : i32, i32
  }
  func.func @transform_2(%arg0: i32) -> (i32, i32) {
    %c0_i32 = arith.constant 0 : i32
    %c0_i32_0 = arith.constant 0 : i32
    %c0_i32_1 = arith.constant 0 : i32
    return %c0_i32, %c0_i32_0 : i32, i32
  }
  func.func @transform_3(%arg0: i32) -> (i32, i32) {
    %c0_i32 = arith.constant 0 : i32
    %c0_i32_0 = arith.constant 0 : i32
    return %arg0, %c0_i32 : i32, i32
  }
}

</mosaic_0001>

<llo_original>
// kernel: tpu_custom_call.1
$region0: #{tpu_custom_call.1}
  #allocation0 [shape = 'u32[]', space=smem, size = 0x4, offset = 0x4, fixed_abs, tag = 'smem constant byte address 0x4 - core index']
  #allocation1 [shape = 'u32[144,128]{1,0:T(1,128)}', space=vmem, size = 0x12000, scoped, tag = 'internal scratch']
  %s0 = inlined_call_operand.hbm [shape: f32[16,32], index: 0, kind: input, shape index: {}]
  %s1 = inlined_call_operand.hbm [shape: f32[32,96], index: 1, kind: input, shape index: {}]
  %s2 = inlined_call_operand.hbm [shape: f32[1,96], index: 2, kind: input, shape index: {}]
  %s3 = inlined_call_operand.hbm [shape: f32[16,96], index: 3, kind: output, shape index: {}]
  %s4 = sld [smem:[#allocation0]]
  $region34: #{tpu_custom_call.1} parent=0
    _
  %s6 = ssub.s32 1, %s4
  %s7 = scalar_select 0, %s6, %s4
  $region1: #{tpu_custom_call.1} parent=0
    #allocation2 [shape = 'u8[8192]{0}', space=vmem, size = 0x2000, scoped, tag = 'input window, operand 0, single buffered']
    #allocation3 [shape = 's32[1]{0}', space=sflag, size = 0x4, scoped, tag = 'scoped memory for tpu_custom_call.1']
    #allocation4 [shape = 's32[1]{0}', space=sflag, size = 0x4, scoped, tag = 'scoped memory for tpu_custom_call.1']
    #allocation5 [shape = 'u8[16384]{0}', space=vmem, size = 0x4000, scoped, tag = 'input window, operand 1, single buffered']
    #allocation6 [shape = 's32[1]{0}', space=sflag, size = 0x4, scoped, tag = 'scoped memory for tpu_custom_call.1']
    #allocation7 [shape = 'u8[512]{0}', space=vmem, size = 0x400, scoped, tag = 'input window, operand 2, single buffered']
    #allocation8 [shape = 'u8[8192]{0}', space=vmem, size = 0x2000, scoped, tag = 'output window, operand 0, single buffered']
    %8 = vsyncpa [#allocation3], 0
    %9 = vsyncpa [#allocation6], 0
    %10 = vsyncpa [#allocation4], 0
    // Predicated region
    $region2: #{tpu_custom_call.1} parent=1 // pred_check
      _
    $region3: #{tpu_custom_call.1} parent=1 // pred_check_branch
      %12 = sbr.rel (0) target = $region5
    $region4: #{tpu_custom_call.1} parent=1 // pred_region
      %s14 = ssub.s32 256, 256
      %15 = vsyncadd [#allocation3], %s14
      %s16 = sshll.u32 [#allocation2], 4
      %s17 = int_to_ptr.vmem [resolvable:$true] %s16
      %22 = dma.hbm_to_vmem [thread:$0]  %s0, 256, %s17, [#allocation3], 128, 128, 8
    $region5: #{tpu_custom_call.1} parent=1 // pred_fallthru
      _
    // Predicated region
    $region6: #{tpu_custom_call.1} parent=1 // pred_check
      _
    $region7: #{tpu_custom_call.1} parent=1 // pred_check_branch
      %24 = sbr.rel (0) target = $region9
    $region8: #{tpu_custom_call.1} parent=1 // pred_region
      %s26 = ssub.s32 512, 512
      %27 = vsyncadd [#allocation6], %s26
      %s28 = sshll.u32 [#allocation5], 4
      %s29 = int_to_ptr.vmem [resolvable:$true] %s28
      %34 = dma.hbm_to_vmem [thread:$0]  %s1, 512, %s29, [#allocation6], 128, 128, 8
    $region9: #{tpu_custom_call.1} parent=1 // pred_fallthru
      _
    // Predicated region
    $region10: #{tpu_custom_call.1} parent=1 // pred_check
      _
    $region11: #{tpu_custom_call.1} parent=1 // pred_check_branch
      %36 = sbr.rel (0) target = $region13
    $region12: #{tpu_custom_call.1} parent=1 // pred_region
      %s38 = ssub.s32 16, 16
      %39 = vsyncadd [#allocation6], %s38
      %s41 = sshll.u32 [#allocation7], 4
      %s42 = int_to_ptr.vmem [resolvable:$true] %s41
      %44 = dma.hbm_to_vmem [thread:$0]  %s2, 16, %s42, [#allocation6]
    $region13: #{tpu_custom_call.1} parent=1 // pred_fallthru
      _
    // Predicated region
    $region14: #{tpu_custom_call.1} parent=1 // pred_check
      _
    $region15: #{tpu_custom_call.1} parent=1 // pred_check_branch
      %46 = sbr.rel (0) target = $region17
    $region16: #{tpu_custom_call.1} parent=1 // pred_region
      %47 = dma.done [#allocation3], 256
    $region17: #{tpu_custom_call.1} parent=1 // pred_fallthru
      _
    // Predicated region
    $region18: #{tpu_custom_call.1} parent=1 // pred_check
      _
    $region19: #{tpu_custom_call.1} parent=1 // pred_check_branch
      %49 = sbr.rel (0) target = $region21
    $region20: #{tpu_custom_call.1} parent=1 // pred_region
      %50 = dma.done [#allocation6], 512
    $region21: #{tpu_custom_call.1} parent=1 // pred_fallthru
      _
    // Predicated region
    $region22: #{tpu_custom_call.1} parent=1 // pred_check
      _
    $region23: #{tpu_custom_call.1} parent=1 // pred_check_branch
      %52 = sbr.rel (0) target = $region25
    $region24: #{tpu_custom_call.1} parent=1 // pred_region
      %53 = dma.done [#allocation6], 16
    $region25: #{tpu_custom_call.1} parent=1 // pred_fallthru
      _
    %v55 = vld [vmem:[#allocation2] sm:$0xff]
    %v56 = vld [vmem:[#allocation2 + $0x8] sm:$0xff]
    %v57 = vpack.c.bf16 %v56, %v55
    %v58 = vld [vmem:[#allocation5] sm:$0xff]
    %v59 = vld [vmem:[#allocation5 + $0x8] sm:$0xff]
    %v60 = vld [vmem:[#allocation5 + $0x10] sm:$0xff]
    %v61 = vld [vmem:[#allocation5 + $0x18] sm:$0xff]
    %v62 = vpack.c.bf16 %v59, %v58
    %v63 = vpack.c.bf16 %v61, %v60
    %v64 = vld [vmem:[#allocation7] sm:$0x1]
    %v66 = vlaneseq
    %v67 = vshrl.u32 %v66, 7
    %v68 = vsub.s32 0, %v67
    %v69 = vrot.slane %v64, %v68
    %vm71 = vcmask 261120
    %v73 = vsel %vm71, %v57, 0
    %75 = vmatprep.subr.bf16.mxu0 0
    %76 = vmatpush1.bf16.msra.mxu0 %v62
    %77 = vmatprep.subr.bf16.mxu0 0
    %78 = vmatpush1.bf16.msra.mxu0 %v63
    %79 = vmatprep.subr.bf16.mxu0 0
    %80 = vmatpush1.bf16.msra.mxu0 0
    %81 = vmatprep.subr.bf16.mxu0 0
    %82 = vmatpush1.bf16.msra.mxu0 0
    %83 = vmatprep.subr.bf16.mxu0 0
    %84 = vmatpush1.bf16.msra.mxu0 0
    %85 = vmatprep.subr.bf16.mxu0 0
    %86 = vmatpush1.bf16.msra.mxu0 0
    %87 = vmatprep.subr.bf16.mxu0 0
    %88 = vmatpush1.bf16.msra.mxu0 0
    %89 = vmatprep.subr.bf16.mxu0 0
    %90 = vmatpush1.bf16.msra.mxu0 0
    %91 = vmatprep.subr.bf16.mxu0 0
    %92 = vmatpush1.bf16.msra.mxu0 0
    %93 = vmatprep.subr.bf16.mxu0 0
    %94 = vmatpush1.bf16.msra.mxu0 0
    %95 = vmatprep.subr.bf16.mxu0 0
    %96 = vmatpush1.bf16.msra.mxu0 0
    %97 = vmatprep.subr.bf16.mxu0 0
    %98 = vmatpush1.bf16.msra.mxu0 0
    %99 = vmatprep.subr.bf16.mxu0 0
    %100 = vmatpush1.bf16.msra.mxu0 0
    %101 = vmatprep.subr.bf16.mxu0 0
    %102 = vmatpush1.bf16.msra.mxu0 0
    %103 = vmatprep.subr.bf16.mxu0 0
    %104 = vmatpush1.bf16.msra.mxu0 0
    %105 = vmatprep.subr.bf16.mxu0 0
    %106 = vmatpush1.bf16.msra.mxu0 0
    %107 = vmatprep.mubr.bf16.mxu0 0
    %108 = vmatmul.mubr.bf16.gmra.mrb[0].mxu0 %v73
    %v109 = vpop.f32.mrb[0].mxu0
    %v110 = vadd.f32 %v69, %v109
    %v111 = vpop.f32.mrb[0].mxu0
    %v112 = vpop.f32.mrb[0].mxu0
    %v113 = vadd.f32 %v69, %v112
    %v114 = vpop.f32.mrb[0].mxu0
    %115 = vdwg.mxu0
    %vm116 = vcmask 785408
    %117 = vst.msk [vmem:[#allocation8] sm:$0xff] %vm116, %v110
    %118 = vst.msk [vmem:[#allocation8 + $0x8] sm:$0xff] %vm116, %v113
    // Predicated region
    $region26: #{tpu_custom_call.1} parent=1 // pred_check
      _
    $region27: #{tpu_custom_call.1} parent=1 // pred_check_branch
      %120 = sbr.rel (0) target = $region29
    $region28: #{tpu_custom_call.1} parent=1 // pred_region
      %s122 = ssub.s32 256, 256
      %123 = vsyncadd [#allocation4], %s122
      %s124 = sshll.u32 [#allocation8], 4
      %s125 = int_to_ptr.vmem [resolvable:$true] %s124
      %130 = dma.vmem_to_hbm [thread:$0]  %s125, 256, %s3, [#allocation4], 128, 128, 8
    $region29: #{tpu_custom_call.1} parent=1 // pred_fallthru
      _
    // Predicated region
    $region30: #{tpu_custom_call.1} parent=1 // pred_check
      _
    $region31: #{tpu_custom_call.1} parent=1 // pred_check_branch
      %132 = sbr.rel (0) target = $region33
    $region32: #{tpu_custom_call.1} parent=1 // pred_region
      %133 = dma.done [#allocation4], 256
    $region33: #{tpu_custom_call.1} parent=1 // pred_fallthru
      _
    %134 = vsyncpa [#allocation3], 1
    %135 = vsyncpa [#allocation6], 1
    %136 = vsyncpa [#allocation4], 1

</llo_original>
